<compile_context>
chip_gen: v7x
topology: tpu7x:2x2x1
jax: 0.10.0
libtpu: 0.0.40
codegen_flags: <defaults>
</compile_context>

<pallas_src>
import functools

import numpy as np
import jax
import jax.numpy as jnp
from jax import lax
from jax.experimental import pallas as pl
from jax.experimental.pallas import tpu as pltpu


def _round_up(x, m):
    return ((x + m - 1) // m) * m


# ---------------------------------------------------------------------------
# Fused Pallas kernel: image encoder + text encoder + CLIP similarity head.
# ---------------------------------------------------------------------------
def _ftclip_fused_kernel(scale_ref,       # SMEM [1]           f32 log logit scale
                         img_x_ref,       # VMEM [Bi*Np, Kp]   bf16 flattened patches
                         w_patch_ref,     # VMEM [Kp, Dv]      bf16
                         w_img_proj_ref,  # VMEM [Dv, E]       bf16
                         txt_x_ref,       # VMEM [Bt*L, Dt]    bf16 gathered token embeds
                         w_txt_ref,       # VMEM [Dt, Dt]      bf16
                         w_txt_proj_ref,  # VMEM [Dt, E]       bf16
                         out_ref,         # VMEM [Bi, Bt_lane] f32 similarity logits
                         *, b_img, n_patch, b_txt, seq_len, bt_lane):
    f32 = jnp.float32

    # ---- image encoder: patch-embed matmul -> mean pool -> projection ------
    h_img = jnp.dot(img_x_ref[...], w_patch_ref[...], preferred_element_type=f32)
    pooled_img = jnp.mean(h_img.reshape(b_img, n_patch, h_img.shape[-1]), axis=1)
    i_e = jnp.dot(pooled_img.astype(jnp.bfloat16), w_img_proj_ref[...],
                  preferred_element_type=f32)                          # [Bi, E] f32

    # ---- text encoder: token matmul -> mean pool -> projection -------------
    h_txt = jnp.dot(txt_x_ref[...], w_txt_ref[...], preferred_element_type=f32)
    pooled_txt = jnp.mean(h_txt.reshape(b_txt, seq_len, h_txt.shape[-1]), axis=1)
    t_e = jnp.dot(pooled_txt.astype(jnp.bfloat16), w_txt_proj_ref[...],
                  preferred_element_type=f32)                          # [Bt, E] f32

    # ---- L2 normalization in f32 (rsqrt -> EUP slot) ------------------------
    # NOTE: no epsilon, matching the PyTorch module (a zero-norm row would NaN).
    i_n = i_e * lax.rsqrt(jnp.sum(i_e * i_e, axis=-1, keepdims=True))
    t_n = t_e * lax.rsqrt(jnp.sum(t_e * t_e, axis=-1, keepdims=True))

    # ---- pad text rows (with zeros, post-normalization -> no NaN) so the
    #      [Bi, Bt_lane] output store is a full lane-dense block --------------
    if bt_lane > b_txt:
        t_n = jnp.concatenate(
            [t_n, jnp.zeros((bt_lane - b_txt, t_n.shape[-1]), f32)], axis=0)

    # ---- logit-scaled similarity: contract last axes of both operands ------
    sim = lax.dot_general(i_n.astype(jnp.bfloat16), t_n.astype(jnp.bfloat16),
                          dimension_numbers=(((1,), (1,)), ((), ())),
                          preferred_element_type=f32)                  # [Bi, Bt_lane]
    out_ref[...] = jnp.exp(scale_ref[0]) * sim


# ---------------------------------------------------------------------------
# pallas_call wrapper
# ---------------------------------------------------------------------------
_VMEM = pl.BlockSpec(memory_space=pltpu.MemorySpace.VMEM)
_SMEM = pl.BlockSpec(memory_space=pltpu.MemorySpace.SMEM)


def run_ftclip_fused(log_logit_scale, img_x, w_patch, w_img_proj,
                     txt_x, w_txt, w_txt_proj,
                     *, b_img, n_patch, b_txt, seq_len, bt_lane):
    kernel = functools.partial(_ftclip_fused_kernel, b_img=b_img,
                               n_patch=n_patch, b_txt=b_txt,
                               seq_len=seq_len, bt_lane=bt_lane)
    # TODO(synk): at real CLIP widths (ViT-B/32: ~50*B patches, width 768) this
    # single-block call should get a tiled grid (BlockSpec over rows + K,
    # f32 VMEM accumulator with pl.when init/finalize, reduction axis last,
    # dimension_semantics=('parallel', ..., 'arbitrary'), tiles budgeted for
    # v7x's 64 MiB VMEM).  At the toy shapes here every operand is < 100 KiB,
    # so a single whole-array block is optimal.
    return pl.pallas_call(
        kernel,
        out_shape=jax.ShapeDtypeStruct((b_img, bt_lane), jnp.float32),
        in_specs=[_SMEM] + [_VMEM] * 6,
        out_specs=_VMEM,
    )(log_logit_scale, img_x, w_patch, w_img_proj, txt_x, w_txt, w_txt_proj)


# ---------------------------------------------------------------------------
# Parameters (synthetic encoders) + jitted forward with host-side glue
# ---------------------------------------------------------------------------
def make_ftclip_params(key, *, patch=8, in_chans=3, vis_width=128,
                       txt_width=128, embed_dim=128, vocab=64):
    k = jax.random.split(key, 5)
    patch_dim = in_chans * patch * patch
    scale = 0.02
    return {
        "w_patch": scale * jax.random.normal(k[0], (patch_dim, vis_width), jnp.float32),
        "w_img_proj": scale * jax.random.normal(k[1], (vis_width, embed_dim), jnp.float32),
        "tok_embed": scale * jax.random.normal(k[2], (vocab, txt_width), jnp.float32),
        "w_txt": scale * jax.random.normal(k[3], (txt_width, txt_width), jnp.float32),
        "w_txt_proj": scale * jax.random.normal(k[4], (txt_width, embed_dim), jnp.float32),
        # nn.Parameter(torch.ones([]) * np.log(1 / 0.07))
        "log_logit_scale": jnp.array([np.log(1.0 / 0.07)], jnp.float32),
    }


def _pad_batch(x, target):
    """Pad the leading (batch) axis to `target` by replicating the last example
    (replication, not zeros, keeps feature norms finite)."""
    b = x.shape[0]
    if target == b:
        return x
    return jnp.concatenate([x, jnp.repeat(x[-1:], target - b, axis=0)], axis=0)


@functools.partial(jax.jit, static_argnames=("patch",))
def ftclip_forward(params, images, texts, *, patch=8):
    b_img, c, h, w = images.shape
    b_txt, seq_len = texts.shape
    gh, gw = h // patch, w // patch
    n_patch = gh * gw

    # sublane-align batch rows; lane-align the output's text axis.
    bi_pad = max(8, _round_up(b_img, 8))
    bt_pad = max(8, _round_up(b_txt, 8))
    bt_lane = max(128, _round_up(bt_pad, 128))

    images_p = _pad_batch(images, bi_pad)
    texts_p = _pad_batch(texts, bt_pad)

    # CLIP conv1 (stride = kernel = patch) as a patch-flatten matmul; K padded
    # to a multiple of 256 so the v6e/v7x 256-wide MXU stays fully fed.
    x_img = images_p.reshape(bi_pad, c, gh, patch, gw, patch)
    x_img = x_img.transpose(0, 2, 4, 1, 3, 5).reshape(bi_pad * n_patch,
                                                      c * patch * patch)
    k_dim = c * patch * patch
    k_pad = _round_up(k_dim, 256)
    x_img = jnp.pad(x_img, ((0, 0), (0, k_pad - k_dim))).astype(jnp.bfloat16)
    w_patch = jnp.pad(params["w_patch"],
                      ((0, k_pad - k_dim), (0, 0))).astype(jnp.bfloat16)

    # token-embedding gather (host glue, fused under jit).
    # TODO(synk): with a real vocab/context length, move this gather into the
    # kernel via PrefetchScalarGridSpec (token ids as scalar prefetch + a row
    # index_map) instead of materializing [B*L, D] in HBM.
    x_txt = jnp.take(params["tok_embed"], texts_p, axis=0)
    x_txt = x_txt.reshape(bt_pad * seq_len, -1).astype(jnp.bfloat16)

    sim = run_ftclip_fused(
        params["log_logit_scale"], x_img, w_patch,
        params["w_img_proj"].astype(jnp.bfloat16),
        x_txt, params["w_txt"].astype(jnp.bfloat16),
        params["w_txt_proj"].astype(jnp.bfloat16),
        b_img=bi_pad, n_patch=n_patch, b_txt=bt_pad, seq_len=seq_len,
        bt_lane=bt_lane)
    return sim[:b_img, :b_txt]


# ---------------------------------------------------------------------------
# Plain-JAX f32 reference of the same math (sanity check only)
# ---------------------------------------------------------------------------
def _reference_forward(params, images, texts, patch=8):
    b, c, h, w = images.shape
    gh, gw = h // patch, w // patch
    x = images.reshape(b, c, gh, patch, gw, patch).transpose(0, 2, 4, 1, 3, 5)
    x = x.reshape(b, gh * gw, c * patch * patch)
    i_e = jnp.mean(x @ params["w_patch"], axis=1) @ params["w_img_proj"]
    t = jnp.take(params["tok_embed"], texts, axis=0)
    t_e = jnp.mean(t @ params["w_txt"], axis=1) @ params["w_txt_proj"]
    i_n = i_e / jnp.linalg.norm(i_e, axis=-1, keepdims=True)
    t_n = t_e / jnp.linalg.norm(t_e, axis=-1, keepdims=True)
    return jnp.exp(params["log_logit_scale"][0]) * (i_n @ t_n.T)


if __name__ == "__main__":
    key = jax.random.PRNGKey(0)
    k_model, k_img, k_txt = jax.random.split(key, 3)

    params = make_ftclip_params(k_model)

    # small deterministic inputs consistent with the module's forward
    images = jax.random.normal(k_img, (2, 3, 32, 32), jnp.float32)   # NCHW
    texts = jax.random.randint(k_txt, (2, 8), 0, 64, jnp.int32)      # token ids

    sim = ftclip_forward(params, images, texts, patch=8)
    sim = jax.block_until_ready(sim)

    ref = _reference_forward(params, images, texts, patch=8)
    # loose tolerance: kernel matmul operands run in bf16 (f32 accumulation)
    np.testing.assert_allclose(np.asarray(sim), np.asarray(ref),
                               rtol=5e-2, atol=1e-1)
    assert sim.shape == (2, 2) and sim.dtype == jnp.float32
    print("KERNEL_OK")
</pallas_src>

<mosaic_0001>
module attributes {stable_mosaic.version = 11 : i64} {
  func.func @_ftclip_fused_kernel(%arg0: memref<1xf32, #tpu.memory_space<smem>>, %arg1: memref<128x256xbf16, #tpu.memory_space<vmem>>, %arg2: memref<256x128xbf16, #tpu.memory_space<vmem>>, %arg3: memref<128x128xbf16, #tpu.memory_space<vmem>>, %arg4: memref<64x128xbf16, #tpu.memory_space<vmem>>, %arg5: memref<128x128xbf16, #tpu.memory_space<vmem>>, %arg6: memref<128x128xbf16, #tpu.memory_space<vmem>>, %arg7: memref<8x128xf32, #tpu.memory_space<vmem>>) attributes {dimension_semantics = [], scalar_prefetch = 0 : i64, scratch_operands = 0 : i64, tpu.core_type = #tpu.core_type<tc>} {
    %c0 = arith.constant 0 : index
    %c0_0 = arith.constant 0 : index
    %0 = vector.load %arg1[%c0, %c0_0] : memref<128x256xbf16, #tpu.memory_space<vmem>>, vector<128x256xbf16>
    %c0_1 = arith.constant 0 : index
    %c0_2 = arith.constant 0 : index
    %1 = vector.load %arg2[%c0_1, %c0_2] : memref<256x128xbf16, #tpu.memory_space<vmem>>, vector<256x128xbf16>
    %cst = arith.constant dense<0.000000e+00> : vector<128x128xf32>
    %2 = tpu.matmul %0, %1, %cst {dimension_numbers = #tpu.dot_dimension_numbers<[1], [0], [0], [1], [0, 0, 1, 1], [], []>} : vector<128x256xbf16>, vector<256x128xbf16>, vector<128x128xf32> -> vector<128x128xf32>
    %3 = vector.shape_cast %2 : vector<128x128xf32> to vector<8x16x128xf32>
    %cst_3 = arith.constant dense<0.000000e+00> : vector<8x128xf32>
    %4 = vector.multi_reduction <add>, %3, %cst_3 [1] : vector<8x16x128xf32> to vector<8x128xf32>
    %cst_4 = arith.constant 1.600000e+01 : f32
    %5 = vector.broadcast %cst_4 : f32 to vector<8x128xf32>
    %6 = arith.divf %4, %5 : vector<8x128xf32>
    %7 = arith.truncf %6 : vector<8x128xf32> to vector<8x128xbf16>
    %c0_5 = arith.constant 0 : index
    %c0_6 = arith.constant 0 : index
    %8 = vector.load %arg3[%c0_5, %c0_6] : memref<128x128xbf16, #tpu.memory_space<vmem>>, vector<128x128xbf16>
    %cst_7 = arith.constant dense<0.000000e+00> : vector<8x128xf32>
    %9 = tpu.matmul %7, %8, %cst_7 {dimension_numbers = #tpu.dot_dimension_numbers<[1], [0], [0], [1], [0, 0, 1, 1], [], []>} : vector<8x128xbf16>, vector<128x128xbf16>, vector<8x128xf32> -> vector<8x128xf32>
    %c0_8 = arith.constant 0 : index
    %c0_9 = arith.constant 0 : index
    %10 = vector.load %arg4[%c0_8, %c0_9] : memref<64x128xbf16, #tpu.memory_space<vmem>>, vector<64x128xbf16>
    %c0_10 = arith.constant 0 : index
    %c0_11 = arith.constant 0 : index
    %11 = vector.load %arg5[%c0_10, %c0_11] : memref<128x128xbf16, #tpu.memory_space<vmem>>, vector<128x128xbf16>
    %cst_12 = arith.constant dense<0.000000e+00> : vector<64x128xf32>
    %12 = tpu.matmul %10, %11, %cst_12 {dimension_numbers = #tpu.dot_dimension_numbers<[1], [0], [0], [1], [0, 0, 1, 1], [], []>} : vector<64x128xbf16>, vector<128x128xbf16>, vector<64x128xf32> -> vector<64x128xf32>
    %13 = vector.shape_cast %12 : vector<64x128xf32> to vector<8x8x128xf32>
    %cst_13 = arith.constant dense<0.000000e+00> : vector<8x128xf32>
    %14 = vector.multi_reduction <add>, %13, %cst_13 [1] : vector<8x8x128xf32> to vector<8x128xf32>
    %cst_14 = arith.constant 8.000000e+00 : f32
    %15 = vector.broadcast %cst_14 : f32 to vector<8x128xf32>
    %16 = arith.divf %14, %15 : vector<8x128xf32>
    %17 = arith.truncf %16 : vector<8x128xf32> to vector<8x128xbf16>
    %c0_15 = arith.constant 0 : index
    %c0_16 = arith.constant 0 : index
    %18 = vector.load %arg6[%c0_15, %c0_16] : memref<128x128xbf16, #tpu.memory_space<vmem>>, vector<128x128xbf16>
    %cst_17 = arith.constant dense<0.000000e+00> : vector<8x128xf32>
    %19 = tpu.matmul %17, %18, %cst_17 {dimension_numbers = #tpu.dot_dimension_numbers<[1], [0], [0], [1], [0, 0, 1, 1], [], []>} : vector<8x128xbf16>, vector<128x128xbf16>, vector<8x128xf32> -> vector<8x128xf32>
    %20 = arith.mulf %9, %9 : vector<8x128xf32>
    %cst_18 = arith.constant dense<0.000000e+00> : vector<8xf32>
    %21 = vector.multi_reduction <add>, %20, %cst_18 [1] : vector<8x128xf32> to vector<8xf32>
    %22 = vector.shape_cast %21 : vector<8xf32> to vector<8x1xf32>
    %23 = math.rsqrt %22 : vector<8x1xf32>
    %24 = vector.broadcast %23 : vector<8x1xf32> to vector<8x128xf32>
    %25 = arith.mulf %9, %24 : vector<8x128xf32>
    %26 = arith.mulf %19, %19 : vector<8x128xf32>
    %cst_19 = arith.constant dense<0.000000e+00> : vector<8xf32>
    %27 = vector.multi_reduction <add>, %26, %cst_19 [1] : vector<8x128xf32> to vector<8xf32>
    %28 = vector.shape_cast %27 : vector<8xf32> to vector<8x1xf32>
    %29 = math.rsqrt %28 : vector<8x1xf32>
    %30 = vector.broadcast %29 : vector<8x1xf32> to vector<8x128xf32>
    %31 = arith.mulf %19, %30 : vector<8x128xf32>
    %cst_20 = arith.constant 0.000000e+00 : f32
    %32 = vector.broadcast %cst_20 : f32 to vector<120x128xf32>
    %33 = tpu.concatenate %31, %32 in 0 : vector<8x128xf32>, vector<120x128xf32> -> vector<128x128xf32>
    %34 = arith.truncf %25 : vector<8x128xf32> to vector<8x128xbf16>
    %35 = arith.truncf %33 : vector<128x128xf32> to vector<128x128xbf16>
    %cst_21 = arith.constant dense<0.000000e+00> : vector<8x128xf32>
    %36 = tpu.matmul %34, %35, %cst_21 {dimension_numbers = #tpu.dot_dimension_numbers<[1], [1], [0], [0], [0, 0, 1, 0], [], []>} : vector<8x128xbf16>, vector<128x128xbf16>, vector<8x128xf32> -> vector<8x128xf32>
    %c0_22 = arith.constant 0 : index
    %37 = memref.load %arg0[%c0_22] : memref<1xf32, #tpu.memory_space<smem>>
    %38 = math.exp %37 : f32
    %39 = vector.broadcast %38 : f32 to vector<8x128xf32>
    %40 = arith.mulf %39, %36 : vector<8x128xf32>
    %c0_23 = arith.constant 0 : index
    %c0_24 = arith.constant 0 : index
    %41 = vector.load %arg7[%c0_23, %c0_24] : memref<8x128xf32, #tpu.memory_space<vmem>>, vector<8x128xf32>
    tpu.vector_store %arg7[%c0_23, %c0_24], %40 {strides = array<i32>} : memref<8x128xf32, #tpu.memory_space<vmem>>, vector<8x128xf32>,
    return
  }
}

</mosaic_0001>

<llo_original>
// kernel: ftclip_forward.1
$region0: #{ftclip_forward.1}
  #allocation0 [shape = 'u32[]', space=smem, size = 0x4, offset = 0x4, fixed_abs, tag = 'smem constant byte address 0x4 - core index']
  #allocation1 [shape = 'u32[144,128]{1,0:T(1,128)}', space=vmem, size = 0x12000, scoped, tag = 'internal scratch']
  #allocation2 [shape = 'f32[1]{0:T(128)S(6)}', space=smem, size = 0x200, scoped, tag = 'scoped memory for ftclip_forward.1']
  %s0 = inlined_call_operand.<no memory space> [shape: f32[1], index: 0, kind: input, shape index: {}]
  %s1 = inlined_call_operand.vmem [shape: bf16[128,256], index: 1, kind: input, shape index: {}]
  %s2 = inlined_call_operand.vmem [shape: bf16[256,128], index: 2, kind: input, shape index: {}]
  %s3 = inlined_call_operand.vmem [shape: bf16[128,128], index: 3, kind: input, shape index: {}]
  %s4 = inlined_call_operand.vmem [shape: bf16[64,128], index: 4, kind: input, shape index: {}]
  %s5 = inlined_call_operand.vmem [shape: bf16[128,128], index: 5, kind: input, shape index: {}]
  %s6 = inlined_call_operand.vmem [shape: bf16[128,128], index: 6, kind: input, shape index: {}]
  %s7 = inlined_call_operand.vmem [shape: f32[8,128], index: 7, kind: output, shape index: {}]
  %s8 = sld [smem:[#allocation0]]
  $region38: #{ftclip_forward.1} parent=0
    _
  %s10 = ssub.s32 1, %s8
  %s11 = scalar_select 0, %s10, %s8
  %12 = sst [smem:[#allocation2]] %s0
  // Predicated region
  $region2: #{ftclip_forward.1} parent=0 // pred_check
    _
  $region3: #{ftclip_forward.1} parent=0 // pred_check_branch
    %14 = sbr.rel (0) target = $region5
  $region4: #{ftclip_forward.1} parent=0 // pred_region
    _
  $region5: #{ftclip_forward.1} parent=0 // pred_fallthru
    _
  // Predicated region
  $region6: #{ftclip_forward.1} parent=0 // pred_check
    _
  $region7: #{ftclip_forward.1} parent=0 // pred_check_branch
    %16 = sbr.rel (0) target = $region9
  $region8: #{ftclip_forward.1} parent=0 // pred_region
    _
  $region9: #{ftclip_forward.1} parent=0 // pred_fallthru
    _
  // Predicated region
  $region10: #{ftclip_forward.1} parent=0 // pred_check
    _
  $region11: #{ftclip_forward.1} parent=0 // pred_check_branch
    %18 = sbr.rel (0) target = $region13
  $region12: #{ftclip_forward.1} parent=0 // pred_region
    _
  $region13: #{ftclip_forward.1} parent=0 // pred_fallthru
    _
  // Predicated region
  $region14: #{ftclip_forward.1} parent=0 // pred_check
    _
  $region15: #{ftclip_forward.1} parent=0 // pred_check_branch
    %20 = sbr.rel (0) target = $region17
  $region16: #{ftclip_forward.1} parent=0 // pred_region
    _
  $region17: #{ftclip_forward.1} parent=0 // pred_fallthru
    _
  // Predicated region
  $region18: #{ftclip_forward.1} parent=0 // pred_check
    _
  $region19: #{ftclip_forward.1} parent=0 // pred_check_branch
    %22 = sbr.rel (0) target = $region21
  $region20: #{ftclip_forward.1} parent=0 // pred_region
    _
  $region21: #{ftclip_forward.1} parent=0 // pred_fallthru
    _
  // Predicated region
  $region22: #{ftclip_forward.1} parent=0 // pred_check
    _
  $region23: #{ftclip_forward.1} parent=0 // pred_check_branch
    %24 = sbr.rel (0) target = $region25
  $region24: #{ftclip_forward.1} parent=0 // pred_region
    _
  $region25: #{ftclip_forward.1} parent=0 // pred_fallthru
    _
  // Predicated region
  $region26: #{ftclip_forward.1} parent=0 // pred_check
    _
  $region27: #{ftclip_forward.1} parent=0 // pred_check_branch
    %26 = sbr.rel (0) target = $region29
  $region28: #{ftclip_forward.1} parent=0 // pred_region
    _
  $region29: #{ftclip_forward.1} parent=0 // pred_fallthru
    _
  %v28 = vld [vmem:[%s1] sm:$0xff]
  %v29 = vld [vmem:[%s1 + $0x8] sm:$0xff]
  %v30 = vld [vmem:[%s1 + $0x10] sm:$0xff]
  %v31 = vld [vmem:[%s1 + $0x18] sm:$0xff]
  %v32 = vld [vmem:[%s1 + $0x20] sm:$0xff]
  %v33 = vld [vmem:[%s1 + $0x28] sm:$0xff]
  %v34 = vld [vmem:[%s1 + $0x30] sm:$0xff]
  %v35 = vld [vmem:[%s1 + $0x38] sm:$0xff]
  %v36 = vld [vmem:[%s1 + $0x40] sm:$0xff]
  %v37 = vld [vmem:[%s1 + $0x48] sm:$0xff]
  %v38 = vld [vmem:[%s1 + $0x50] sm:$0xff]
  %v39 = vld [vmem:[%s1 + $0x58] sm:$0xff]
  %v40 = vld [vmem:[%s1 + $0x60] sm:$0xff]
  %v41 = vld [vmem:[%s1 + $0x68] sm:$0xff]
  %v42 = vld [vmem:[%s1 + $0x70] sm:$0xff]
  %v43 = vld [vmem:[%s1 + $0x78] sm:$0xff]
  %v44 = vld [vmem:[%s2] sm:$0xf]
  %v45 = vld [vmem:[%s2 + $0x4] sm:$0xf]
  %v46 = vld [vmem:[%s2 + $0x8] sm:$0xf]
  %v47 = vld [vmem:[%s2 + $0xc] sm:$0xf]
  %v48 = vld [vmem:[%s2 + $0x10] sm:$0xf]
  %v49 = vld [vmem:[%s2 + $0x14] sm:$0xf]
  %v50 = vld [vmem:[%s2 + $0x18] sm:$0xf]
  %v51 = vld [vmem:[%s2 + $0x1c] sm:$0xf]
  %v52 = vld [vmem:[%s2 + $0x20] sm:$0xf]
  %v53 = vld [vmem:[%s2 + $0x24] sm:$0xf]
  %v54 = vld [vmem:[%s2 + $0x28] sm:$0xf]
  %v55 = vld [vmem:[%s2 + $0x2c] sm:$0xf]
  %v56 = vld [vmem:[%s2 + $0x30] sm:$0xf]
  %v57 = vld [vmem:[%s2 + $0x34] sm:$0xf]
  %v58 = vld [vmem:[%s2 + $0x38] sm:$0xf]
  %v59 = vld [vmem:[%s2 + $0x3c] sm:$0xf]
  %v60 = vld [vmem:[%s2 + $0x40] sm:$0xf]
  %v61 = vld [vmem:[%s2 + $0x44] sm:$0xf]
  %v62 = vld [vmem:[%s2 + $0x48] sm:$0xf]
  %v63 = vld [vmem:[%s2 + $0x4c] sm:$0xf]
  %v64 = vld [vmem:[%s2 + $0x50] sm:$0xf]
  %v65 = vld [vmem:[%s2 + $0x54] sm:$0xf]
  %v66 = vld [vmem:[%s2 + $0x58] sm:$0xf]
  %v67 = vld [vmem:[%s2 + $0x5c] sm:$0xf]
  %v68 = vld [vmem:[%s2 + $0x60] sm:$0xf]
  %v69 = vld [vmem:[%s2 + $0x64] sm:$0xf]
  %v70 = vld [vmem:[%s2 + $0x68] sm:$0xf]
  %v71 = vld [vmem:[%s2 + $0x6c] sm:$0xf]
  %v72 = vld [vmem:[%s2 + $0x70] sm:$0xf]
  %v73 = vld [vmem:[%s2 + $0x74] sm:$0xf]
  %v74 = vld [vmem:[%s2 + $0x78] sm:$0xf]
  %v75 = vld [vmem:[%s2 + $0x7c] sm:$0xf]
  %v92 = vunpack.c.l.b16 %v28
  %v93 = vunpack.c.h.b16 %v28
  %v94 = vunpack.c.l.b16 %v29
  %v95 = vunpack.c.h.b16 %v29
  %v96 = vunpack.c.l.b16 %v30
  %v97 = vunpack.c.h.b16 %v30
  %v98 = vunpack.c.l.b16 %v31
  %v99 = vunpack.c.h.b16 %v31
  %v100 = vunpack.c.l.b16 %v32
  %v101 = vunpack.c.h.b16 %v32
  %v102 = vunpack.c.l.b16 %v33
  %v103 = vunpack.c.h.b16 %v33
  %v104 = vunpack.c.l.b16 %v34
  %v105 = vunpack.c.h.b16 %v34
  %v106 = vunpack.c.l.b16 %v35
  %v107 = vunpack.c.h.b16 %v35
  %v108 = vunpack.c.l.b16 %v36
  %v109 = vunpack.c.h.b16 %v36
  %v110 = vunpack.c.l.b16 %v37
  %v111 = vunpack.c.h.b16 %v37
  %v112 = vunpack.c.l.b16 %v38
  %v113 = vunpack.c.h.b16 %v38
  %v114 = vunpack.c.l.b16 %v39
  %v115 = vunpack.c.h.b16 %v39
  %v116 = vunpack.c.l.b16 %v40
  %v117 = vunpack.c.h.b16 %v40
  %v118 = vunpack.c.l.b16 %v41
  %v119 = vunpack.c.h.b16 %v41
  %v120 = vunpack.c.l.b16 %v42
  %v121 = vunpack.c.h.b16 %v42
  %v122 = vunpack.c.l.b16 %v43
  %v123 = vunpack.c.h.b16 %v43
  %v124 = vpack.c.b16 %v94, %v92
  %v125 = vpack.c.b16 %v95, %v93
  %v126 = vpack.c.b16 %v98, %v96
  %v127 = vpack.c.b16 %v99, %v97
  %v128 = vpack.c.b16 %v102, %v100
  %v129 = vpack.c.b16 %v103, %v101
  %v130 = vpack.c.b16 %v106, %v104
  %v131 = vpack.c.b16 %v107, %v105
  %v132 = vpack.c.b16 %v110, %v108
  %v133 = vpack.c.b16 %v111, %v109
  %v134 = vpack.c.b16 %v114, %v112
  %v135 = vpack.c.b16 %v115, %v113
  %v136 = vpack.c.b16 %v118, %v116
  %v137 = vpack.c.b16 %v119, %v117
  %v138 = vpack.c.b16 %v122, %v120
  %v139 = vpack.c.b16 %v123, %v121
  %v188 = vunpack.c.l.b16 %v44
  %v189 = vunpack.c.l.b16 %v45
  %v190 = vunpack.c.l.b16 %v46
  %v191 = vunpack.c.l.b16 %v47
  %v192 = vunpack.c.l.b16 %v48
  %v193 = vunpack.c.l.b16 %v49
  %v194 = vunpack.c.l.b16 %v50
  %v195 = vunpack.c.l.b16 %v51
  %v196 = vunpack.c.l.b16 %v52
  %v197 = vunpack.c.l.b16 %v53
  %v198 = vunpack.c.l.b16 %v54
  %v199 = vunpack.c.l.b16 %v55
  %v200 = vunpack.c.l.b16 %v56
  %v201 = vunpack.c.l.b16 %v57
  %v202 = vunpack.c.l.b16 %v58
  %v203 = vunpack.c.l.b16 %v59
  %v204 = vunpack.c.l.b16 %v60
  %v205 = vunpack.c.l.b16 %v61
  %v206 = vunpack.c.l.b16 %v62
  %v207 = vunpack.c.l.b16 %v63
  %v208 = vunpack.c.l.b16 %v64
  %v209 = vunpack.c.l.b16 %v65
  %v210 = vunpack.c.l.b16 %v66
  %v211 = vunpack.c.l.b16 %v67
  %v212 = vunpack.c.l.b16 %v68
  %v213 = vunpack.c.l.b16 %v69
  %v214 = vunpack.c.l.b16 %v70
  %v215 = vunpack.c.l.b16 %v71
  %v216 = vunpack.c.l.b16 %v72
  %v217 = vunpack.c.l.b16 %v73
  %v218 = vunpack.c.l.b16 %v74
  %v219 = vunpack.c.l.b16 %v75
  %v220 = vpack.c.b16 %v189, %v188
  %v221 = vpack.c.b16 %v191, %v190
  %v222 = vpack.c.b16 %v193, %v192
  %v223 = vpack.c.b16 %v195, %v194
  %v224 = vpack.c.b16 %v197, %v196
  %v225 = vpack.c.b16 %v199, %v198
  %v226 = vpack.c.b16 %v201, %v200
  %v227 = vpack.c.b16 %v203, %v202
  %v228 = vpack.c.b16 %v205, %v204
  %v229 = vpack.c.b16 %v207, %v206
  %v230 = vpack.c.b16 %v209, %v208
  %v231 = vpack.c.b16 %v211, %v210
  %v232 = vpack.c.b16 %v213, %v212
  %v233 = vpack.c.b16 %v215, %v214
  %v234 = vpack.c.b16 %v217, %v216
  %v235 = vpack.c.b16 %v219, %v218
  %252 = vmatprep.subr.bf16.mxu0 0
  %253 = vmatpush1.bf16.msra.mxu0 %v220
  %254 = vmatprep.subr.bf16.mxu0 0
  %255 = vmatpush1.bf16.msra.mxu0 %v221
  %256 = vmatprep.subr.bf16.mxu0 0
  %257 = vmatpush1.bf16.msra.mxu0 %v222
  %258 = vmatprep.subr.bf16.mxu0 0
  %259 = vmatpush1.bf16.msra.mxu0 %v223
  %260 = vmatprep.subr.bf16.mxu0 0
  %261 = vmatpush1.bf16.msra.mxu0 %v224
  %262 = vmatprep.subr.bf16.mxu0 0
  %263 = vmatpush1.bf16.msra.mxu0 %v225
  %264 = vmatprep.subr.bf16.mxu0 0
  %265 = vmatpush1.bf16.msra.mxu0 %v226
  %266 = vmatprep.subr.bf16.mxu0 0
  %267 = vmatpush1.bf16.msra.mxu0 %v227
  %268 = vmatprep.subr.bf16.mxu0 0
  %269 = vmatpush1.bf16.msra.mxu0 %v228
  %270 = vmatprep.subr.bf16.mxu0 0
  %271 = vmatpush1.bf16.msra.mxu0 %v229
  %272 = vmatprep.subr.bf16.mxu0 0
  %273 = vmatpush1.bf16.msra.mxu0 %v230
  %274 = vmatprep.subr.bf16.mxu0 0
  %275 = vmatpush1.bf16.msra.mxu0 %v231
  %276 = vmatprep.subr.bf16.mxu0 0
  %277 = vmatpush1.bf16.msra.mxu0 %v232
  %278 = vmatprep.subr.bf16.mxu0 0
  %279 = vmatpush1.bf16.msra.mxu0 %v233
  %280 = vmatprep.subr.bf16.mxu0 0
  %281 = vmatpush1.bf16.msra.mxu0 %v234
  %282 = vmatprep.subr.bf16.mxu0 0
  %283 = vmatpush1.bf16.msra.mxu0 %v235
  %284 = vmatprep.mubr.bf16.mxu0 %v125
  %285 = vmatmul.mubr.bf16.gmra.mrb[0].mxu0 %v124
  %v286 = vpop.f32.mrb[0].mxu0
  %v287 = vadd.f32 0.0, %v286
  %v288 = vpop.f32.mrb[0].mxu0
  %v289 = vpop.f32.mrb[0].mxu0
  %v290 = vadd.f32 0.0, %v289
  %v291 = vpop.f32.mrb[0].mxu0
  %292 = vmatprep.mubr.bf16.mxu0 %v127
  %293 = vmatmul.mubr.bf16.gmra.mrb[0].mxu0 %v126
  %v294 = vpop.f32.mrb[0].mxu0
  %v295 = vadd.f32 0.0, %v294
  %v296 = vpop.f32.mrb[0].mxu0
  %v297 = vpop.f32.mrb[0].mxu0
  %v298 = vadd.f32 0.0, %v297
  %v299 = vpop.f32.mrb[0].mxu0
  %300 = vmatprep.mubr.bf16.mxu0 %v129
  %301 = vmatmul.mubr.bf16.gmra.mrb[0].mxu0 %v128
  %v302 = vpop.f32.mrb[0].mxu0
  %v303 = vadd.f32 0.0, %v302
  %v304 = vpop.f32.mrb[0].mxu0
  %v305 = vpop.f32.mrb[0].mxu0
  %v306 = vadd.f32 0.0, %v305
  %v307 = vpop.f32.mrb[0].mxu0
  %308 = vmatprep.mubr.bf16.mxu0 %v131
  %309 = vmatmul.mubr.bf16.gmra.mrb[0].mxu0 %v130
  %v310 = vpop.f32.mrb[0].mxu0
  %v311 = vadd.f32 0.0, %v310
  %v312 = vpop.f32.mrb[0].mxu0
  %v313 = vpop.f32.mrb[0].mxu0
  %v314 = vadd.f32 0.0, %v313
  %v315 = vpop.f32.mrb[0].mxu0
  %316 = vmatprep.mubr.bf16.mxu0 %v133
  %317 = vmatmul.mubr.bf16.gmra.mrb[0].mxu0 %v132
  %v318 = vpop.f32.mrb[0].mxu0
  %v319 = vadd.f32 0.0, %v318
  %v320 = vpop.f32.mrb[0].mxu0
  %v321 = vpop.f32.mrb[0].mxu0
  %v322 = vadd.f32 0.0, %v321
  %v323 = vpop.f32.mrb[0].mxu0
  %324 = vmatprep.mubr.bf16.mxu0 %v135
  %325 = vmatmul.mubr.bf16.gmra.mrb[0].mxu0 %v134
  %v326 = vpop.f32.mrb[0].mxu0
  %v327 = vadd.f32 0.0, %v326
  %v328 = vpop.f32.mrb[0].mxu0
  %v329 = vpop.f32.mrb[0].mxu0
  %v330 = vadd.f32 0.0, %v329
  %v331 = vpop.f32.mrb[0].mxu0
  %332 = vmatprep.mubr.bf16.mxu0 %v137
  %333 = vmatmul.mubr.bf16.gmra.mrb[0].mxu0 %v136
  %v334 = vpop.f32.mrb[0].mxu0
  %v335 = vadd.f32 0.0, %v334
  %v336 = vpop.f32.mrb[0].mxu0
  %v337 = vpop.f32.mrb[0].mxu0
  %v338 = vadd.f32 0.0, %v337
  %v339 = vpop.f32.mrb[0].mxu0
  %340 = vmatprep.mubr.bf16.mxu0 %v139
  %341 = vmatmul.mubr.bf16.gmra.mrb[0].mxu0 %v138
  %v342 = vpop.f32.mrb[0].mxu0
  %v343 = vadd.f32 0.0, %v342
  %v344 = vpop.f32.mrb[0].mxu0
  %v345 = vpop.f32.mrb[0].mxu0
  %v346 = vadd.f32 0.0, %v345
  %v347 = vpop.f32.mrb[0].mxu0
  %348 = vdwg.mxu0
  %v349 = vadd.f32 %v287, %v290
  %v350 = vrot.slane %v349, 4
  %v351 = vadd.f32 %v349, %v350
  %v352 = vrot.slane %v351, 2
  %v353 = vadd.f32 %v351, %v352
  %v354 = vrot.slane %v353, 1
  %v355 = vadd.f32 %v353, %v354
  %v356 = vadd.f32 %v295, %v298
  %v357 = vrot.slane %v356, 4
  %v358 = vadd.f32 %v356, %v357
  %v359 = vrot.slane %v358, 2
  %v360 = vadd.f32 %v358, %v359
  %v361 = vrot.slane %v360, 1
  %v362 = vadd.f32 %v360, %v361
  %v363 = vadd.f32 %v303, %v306
  %v364 = vrot.slane %v363, 4
  %v365 = vadd.f32 %v363, %v364
  %v366 = vrot.slane %v365, 2
  %v367 = vadd.f32 %v365, %v366
  %v368 = vrot.slane %v367, 1
  %v369 = vadd.f32 %v367, %v368
  %v370 = vadd.f32 %v311, %v314
  %v371 = vrot.slane %v370, 4
  %v372 = vadd.f32 %v370, %v371
  %v373 = vrot.slane %v372, 2
  %v374 = vadd.f32 %v372, %v373
  %v375 = vrot.slane %v374, 1
  %v376 = vadd.f32 %v374, %v375
  %v377 = vadd.f32 %v319, %v322
  %v378 = vrot.slane %v377, 4
  %v379 = vadd.f32 %v377, %v378
  %v380 = vrot.slane %v379, 2
  %v381 = vadd.f32 %v379, %v380
  %v382 = vrot.slane %v381, 1
  %v383 = vadd.f32 %v381, %v382
  %v384 = vadd.f32 %v327, %v330
  %v385 = vrot.slane %v384, 4
  %v386 = vadd.f32 %v384, %v385
  %v387 = vrot.slane %v386, 2
  %v388 = vadd.f32 %v386, %v387
  %v389 = vrot.slane %v388, 1
  %v390 = vadd.f32 %v388, %v389
  %v391 = vadd.f32 %v335, %v338
  %v392 = vrot.slane %v391, 4
  %v393 = vadd.f32 %v391, %v392
  %v394 = vrot.slane %v393, 2
  %v395 = vadd.f32 %v393, %v394
  %v396 = vrot.slane %v395, 1
  %v397 = vadd.f32 %v395, %v396
  %v398 = vadd.f32 %v343, %v346
  %v399 = vrot.slane %v398, 4
  %v400 = vadd.f32 %v398, %v399
  %v401 = vrot.slane %v400, 2
  %v402 = vadd.f32 %v400, %v401
  %v403 = vrot.slane %v402, 1
  %v404 = vadd.f32 %v402, %v403
  %v405 = vrcp.pop 16.0
  %v406 = vmul.f32 %v355, %v405
  %v407 = vmul.f32 %v362, %v405
  %v408 = vmul.f32 %v369, %v405
  %v409 = vmul.f32 %v376, %v405
  %v410 = vmul.f32 %v383, %v405
  %v411 = vmul.f32 %v390, %v405
  %v412 = vmul.f32 %v397, %v405
  %v413 = vmul.f32 %v404, %v405
  %v414 = vpack.c.bf16 %v406, %v406
  %v415 = vpack.c.bf16 %v407, %v407
  %v416 = vpack.c.bf16 %v408, %v408
  %v417 = vpack.c.bf16 %v409, %v409
  %v418 = vpack.c.bf16 %v410, %v410
  %v419 = vpack.c.bf16 %v411, %v411
  %v420 = vpack.c.bf16 %v412, %v412
  %v421 = vpack.c.bf16 %v413, %v413
  %v422 = vld [vmem:[%s3] sm:$0xf]
  %v423 = vld [vmem:[%s3 + $0x4] sm:$0xf]
  %v424 = vld [vmem:[%s3 + $0x8] sm:$0xf]
  %v425 = vld [vmem:[%s3 + $0xc] sm:$0xf]
  %v426 = vld [vmem:[%s3 + $0x10] sm:$0xf]
  %v427 = vld [vmem:[%s3 + $0x14] sm:$0xf]
  %v428 = vld [vmem:[%s3 + $0x18] sm:$0xf]
  %v429 = vld [vmem:[%s3 + $0x1c] sm:$0xf]
  %v430 = vld [vmem:[%s3 + $0x20] sm:$0xf]
  %v431 = vld [vmem:[%s3 + $0x24] sm:$0xf]
  %v432 = vld [vmem:[%s3 + $0x28] sm:$0xf]
  %v433 = vld [vmem:[%s3 + $0x2c] sm:$0xf]
  %v434 = vld [vmem:[%s3 + $0x30] sm:$0xf]
  %v435 = vld [vmem:[%s3 + $0x34] sm:$0xf]
  %v436 = vld [vmem:[%s3 + $0x38] sm:$0xf]
  %v437 = vld [vmem:[%s3 + $0x3c] sm:$0xf]
  %v446 = vunpack.c.l.b16 %v414
  %v447 = vunpack.c.l.b16 %v415
  %v448 = vunpack.c.l.b16 %v416
  %v449 = vunpack.c.l.b16 %v417
  %v450 = vunpack.c.l.b16 %v418
  %v451 = vunpack.c.l.b16 %v419
  %v452 = vunpack.c.l.b16 %v420
  %v453 = vunpack.c.l.b16 %v421
  %vm454 = vcmask 1041409
  %v455 = vsel %vm454, %v447, %v446
  %vm456 = vcmask 1042434
  %v457 = vsel %vm456, %v448, %v455
  %vm458 = vcmask 1043459
  %v459 = vsel %vm458, %v449, %v457
  %vm460 = vcmask 1044484
  %v461 = vsel %vm460, %v450, %v459
  %vm462 = vcmask 1045509
  %v463 = vsel %vm462, %v451, %v461
  %vm464 = vcmask 1046534
  %v465 = vsel %vm464, %v452, %v463
  %vm466 = vcmask 1047559
  %v467 = vsel %vm466, %v453, %v465
  %v468 = vpack.c.b16 %v467, %v467
  %v486 = vunpack.c.l.b16 %v422
  %v487 = vunpack.c.l.b16 %v423
  %v488 = vunpack.c.l.b16 %v424
  %v489 = vunpack.c.l.b16 %v425
  %v490 = vunpack.c.l.b16 %v426
  %v491 = vunpack.c.l.b16 %v427
  %v492 = vunpack.c.l.b16 %v428
  %v493 = vunpack.c.l.b16 %v429
  %v494 = vunpack.c.l.b16 %v430
  %v495 = vunpack.c.l.b16 %v431
  %v496 = vunpack.c.l.b16 %v432
  %v497 = vunpack.c.l.b16 %v433
  %v498 = vunpack.c.l.b16 %v434
  %v499 = vunpack.c.l.b16 %v435
  %v500 = vunpack.c.l.b16 %v436
  %v501 = vunpack.c.l.b16 %v437
  %v502 = vpack.c.b16 %v487, %v486
  %v503 = vpack.c.b16 %v489, %v488
  %v504 = vpack.c.b16 %v491, %v490
  %v505 = vpack.c.b16 %v493, %v492
  %v506 = vpack.c.b16 %v495, %v494
  %v507 = vpack.c.b16 %v497, %v496
  %v508 = vpack.c.b16 %v499, %v498
  %v509 = vpack.c.b16 %v501, %v500
  %518 = vmatprep.subr.bf16.mxu0 0
  %519 = vmatpush1.bf16.msra.mxu0 %v502
  %520 = vmatprep.subr.bf16.mxu0 0
  %521 = vmatpush1.bf16.msra.mxu0 %v503
  %522 = vmatprep.subr.bf16.mxu0 0
  %523 = vmatpush1.bf16.msra.mxu0 %v504
  %524 = vmatprep.subr.bf16.mxu0 0
  %525 = vmatpush1.bf16.msra.mxu0 %v505
  %526 = vmatprep.subr.bf16.mxu0 0
  %527 = vmatpush1.bf16.msra.mxu0 %v506
  %528 = vmatprep.subr.bf16.mxu0 0
  %529 = vmatpush1.bf16.msra.mxu0 %v507
  %530 = vmatprep.subr.bf16.mxu0 0
  %531 = vmatpush1.bf16.msra.mxu0 %v508
  %532 = vmatprep.subr.bf16.mxu0 0
  %533 = vmatpush1.bf16.msra.mxu0 %v509
  %534 = vmatprep.subr.bf16.mxu0 0
  %535 = vmatpush1.bf16.msra.mxu0 0
  %536 = vmatprep.subr.bf16.mxu0 0
  %537 = vmatpush1.bf16.msra.mxu0 0
  %538 = vmatprep.subr.bf16.mxu0 0
  %539 = vmatpush1.bf16.msra.mxu0 0
  %540 = vmatprep.subr.bf16.mxu0 0
  %541 = vmatpush1.bf16.msra.mxu0 0
  %542 = vmatprep.subr.bf16.mxu0 0
  %543 = vmatpush1.bf16.msra.mxu0 0
  %544 = vmatprep.subr.bf16.mxu0 0
  %545 = vmatpush1.bf16.msra.mxu0 0
  %546 = vmatprep.subr.bf16.mxu0 0
  %547 = vmatpush1.bf16.msra.mxu0 0
  %548 = vmatprep.subr.bf16.mxu0 0
  %549 = vmatpush1.bf16.msra.mxu0 0
  %550 = vmatprep.mubr.bf16.mxu0 0
  %551 = vmatmul.mubr.bf16.gmra.mrb[0].mxu0 %v468
  %v552 = vpop.f32.mrb[0].mxu0
  %v553 = vadd.f32 0.0, %v552
  %v554 = vpop.f32.mrb[0].mxu0
  %v555 = vpop.f32.mrb[0].mxu0
  %v556 = vpop.f32.mrb[0].mxu0
  %557 = vdwg.mxu0
  %v558 = vld [vmem:[%s4] sm:$0xf]
  %v559 = vld [vmem:[%s4 + $0x4] sm:$0xf]
  %v560 = vld [vmem:[%s4 + $0x8] sm:$0xf]
  %v561 = vld [vmem:[%s4 + $0xc] sm:$0xf]
  %v562 = vld [vmem:[%s4 + $0x10] sm:$0xf]
  %v563 = vld [vmem:[%s4 + $0x14] sm:$0xf]
  %v564 = vld [vmem:[%s4 + $0x18] sm:$0xf]
  %v565 = vld [vmem:[%s4 + $0x1c] sm:$0xf]
  %v566 = vld [vmem:[%s5] sm:$0xf]
  %v567 = vld [vmem:[%s5 + $0x4] sm:$0xf]
  %v568 = vld [vmem:[%s5 + $0x8] sm:$0xf]
  %v569 = vld [vmem:[%s5 + $0xc] sm:$0xf]
  %v570 = vld [vmem:[%s5 + $0x10] sm:$0xf]
  %v571 = vld [vmem:[%s5 + $0x14] sm:$0xf]
  %v572 = vld [vmem:[%s5 + $0x18] sm:$0xf]
  %v573 = vld [vmem:[%s5 + $0x1c] sm:$0xf]
  %v574 = vld [vmem:[%s5 + $0x20] sm:$0xf]
  %v575 = vld [vmem:[%s5 + $0x24] sm:$0xf]
  %v576 = vld [vmem:[%s5 + $0x28] sm:$0xf]
  %v577 = vld [vmem:[%s5 + $0x2c] sm:$0xf]
  %v578 = vld [vmem:[%s5 + $0x30] sm:$0xf]
  %v579 = vld [vmem:[%s5 + $0x34] sm:$0xf]
  %v580 = vld [vmem:[%s5 + $0x38] sm:$0xf]
  %v581 = vld [vmem:[%s5 + $0x3c] sm:$0xf]
  %v590 = vunpack.c.l.b16 %v558
  %v591 = vunpack.c.l.b16 %v559
  %v592 = vunpack.c.l.b16 %v560
  %v593 = vunpack.c.l.b16 %v561
  %v594 = vunpack.c.l.b16 %v562
  %v595 = vunpack.c.l.b16 %v563
  %v596 = vunpack.c.l.b16 %v564
  %v597 = vunpack.c.l.b16 %v565
  %v598 = vpack.c.b16 %v591, %v590
  %v599 = vpack.c.b16 %v593, %v592
  %v600 = vpack.c.b16 %v595, %v594
  %v601 = vpack.c.b16 %v597, %v596
  %v622 = vunpack.c.l.b16 %v566
  %v623 = vunpack.c.l.b16 %v567
  %v624 = vunpack.c.l.b16 %v568
  %v625 = vunpack.c.l.b16 %v569
  %v626 = vunpack.c.l.b16 %v570
  %v627 = vunpack.c.l.b16 %v571
  %v628 = vunpack.c.l.b16 %v572
  %v629 = vunpack.c.l.b16 %v573
  %v630 = vunpack.c.l.b16 %v574
  %v631 = vunpack.c.l.b16 %v575
  %v632 = vunpack.c.l.b16 %v576
  %v633 = vunpack.c.l.b16 %v577
  %v634 = vunpack.c.l.b16 %v578
  %v635 = vunpack.c.l.b16 %v579
  %v636 = vunpack.c.l.b16 %v580
  %v637 = vunpack.c.l.b16 %v581
  %v638 = vpack.c.b16 %v623, %v622
  %v639 = vpack.c.b16 %v625, %v624
  %v640 = vpack.c.b16 %v627, %v626
  %v641 = vpack.c.b16 %v629, %v628
  %v642 = vpack.c.b16 %v631, %v630
  %v643 = vpack.c.b16 %v633, %v632
  %v644 = vpack.c.b16 %v635, %v634
  %v645 = vpack.c.b16 %v637, %v636
  %654 = vmatprep.subr.bf16.mxu0 0
  %655 = vmatpush1.bf16.msra.mxu0 %v638
  %656 = vmatprep.subr.bf16.mxu0 0
  %657 = vmatpush1.bf16.msra.mxu0 %v639
  %658 = vmatprep.subr.bf16.mxu0 0
  %659 = vmatpush1.bf16.msra.mxu0 %v640
  %660 = vmatprep.subr.bf16.mxu0 0
  %661 = vmatpush1.bf16.msra.mxu0 %v641
  %662 = vmatprep.subr.bf16.mxu0 0
  %663 = vmatpush1.bf16.msra.mxu0 %v642
  %664 = vmatprep.subr.bf16.mxu0 0
  %665 = vmatpush1.bf16.msra.mxu0 %v643
  %666 = vmatprep.subr.bf16.mxu0 0
  %667 = vmatpush1.bf16.msra.mxu0 %v644
  %668 = vmatprep.subr.bf16.mxu0 0
  %669 = vmatpush1.bf16.msra.mxu0 %v645
  %670 = vmatprep.subr.bf16.mxu0 0
  %671 = vmatpush1.bf16.msra.mxu0 0
  %672 = vmatprep.subr.bf16.mxu0 0
  %673 = vmatpush1.bf16.msra.mxu0 0
  %674 = vmatprep.subr.bf16.mxu0 0
  %675 = vmatpush1.bf16.msra.mxu0 0
  %676 = vmatprep.subr.bf16.mxu0 0
  %677 = vmatpush1.bf16.msra.mxu0 0
  %678 = vmatprep.subr.bf16.mxu0 0
  %679 = vmatpush1.bf16.msra.mxu0 0
  %680 = vmatprep.subr.bf16.mxu0 0
  %681 = vmatpush1.bf16.msra.mxu0 0
  %682 = vmatprep.subr.bf16.mxu0 0
  %683 = vmatpush1.bf16.msra.mxu0 0
  %684 = vmatprep.subr.bf16.mxu0 0
  %685 = vmatpush1.bf16.msra.mxu0 0
  %686 = vmatprep.mubr.bf16.mxu0 0
  %687 = vmatmul.mubr.bf16.gmra.mrb[0].mxu0 %v598
  %v688 = vpop.f32.mrb[0].mxu0
  %v689 = vadd.f32 0.0, %v688
  %v690 = vpop.f32.mrb[0].mxu0
  %v691 = vpop.f32.mrb[0].mxu0
  %v692 = vadd.f32 0.0, %v691
  %v693 = vpop.f32.mrb[0].mxu0
  %694 = vmatprep.mubr.bf16.mxu0 0
  %695 = vmatmul.mubr.bf16.gmra.mrb[0].mxu0 %v599
  %v696 = vpop.f32.mrb[0].mxu0
  %v697 = vadd.f32 0.0, %v696
  %v698 = vpop.f32.mrb[0].mxu0
  %v699 = vpop.f32.mrb[0].mxu0
  %v700 = vadd.f32 0.0, %v699
  %v701 = vpop.f32.mrb[0].mxu0
  %702 = vmatprep.mubr.bf16.mxu0 0
  %703 = vmatmul.mubr.bf16.gmra.mrb[0].mxu0 %v600
  %v704 = vpop.f32.mrb[0].mxu0
  %v705 = vadd.f32 0.0, %v704
  %v706 = vpop.f32.mrb[0].mxu0
  %v707 = vpop.f32.mrb[0].mxu0
  %v708 = vadd.f32 0.0, %v707
  %v709 = vpop.f32.mrb[0].mxu0
  %710 = vmatprep.mubr.bf16.mxu0 0
  %711 = vmatmul.mubr.bf16.gmra.mrb[0].mxu0 %v601
  %v712 = vpop.f32.mrb[0].mxu0
  %v713 = vadd.f32 0.0, %v712
  %v714 = vpop.f32.mrb[0].mxu0
  %v715 = vpop.f32.mrb[0].mxu0
  %v716 = vadd.f32 0.0, %v715
  %v717 = vpop.f32.mrb[0].mxu0
  %718 = vdwg.mxu0
  %v719 = vrot.slane %v689, 4
  %v720 = vadd.f32 %v689, %v719
  %v721 = vrot.slane %v720, 2
  %v722 = vadd.f32 %v720, %v721
  %v723 = vrot.slane %v722, 1
  %v724 = vadd.f32 %v722, %v723
  %v725 = vrot.slane %v692, 4
  %v726 = vadd.f32 %v692, %v725
  %v727 = vrot.slane %v726, 2
  %v728 = vadd.f32 %v726, %v727
  %v729 = vrot.slane %v728, 1
  %v730 = vadd.f32 %v728, %v729
  %v731 = vrot.slane %v697, 4
  %v732 = vadd.f32 %v697, %v731
  %v733 = vrot.slane %v732, 2
  %v734 = vadd.f32 %v732, %v733
  %v735 = vrot.slane %v734, 1
  %v736 = vadd.f32 %v734, %v735
  %v737 = vrot.slane %v700, 4
  %v738 = vadd.f32 %v700, %v737
  %v739 = vrot.slane %v738, 2
  %v740 = vadd.f32 %v738, %v739
  %v741 = vrot.slane %v740, 1
  %v742 = vadd.f32 %v740, %v741
  %v743 = vrot.slane %v705, 4
  %v744 = vadd.f32 %v705, %v743
  %v745 = vrot.slane %v744, 2
  %v746 = vadd.f32 %v744, %v745
  %v747 = vrot.slane %v746, 1
  %v748 = vadd.f32 %v746, %v747
  %v749 = vrot.slane %v708, 4
  %v750 = vadd.f32 %v708, %v749
  %v751 = vrot.slane %v750, 2
  %v752 = vadd.f32 %v750, %v751
  %v753 = vrot.slane %v752, 1
  %v754 = vadd.f32 %v752, %v753
  %v755 = vrot.slane %v713, 4
  %v756 = vadd.f32 %v713, %v755
  %v757 = vrot.slane %v756, 2
  %v758 = vadd.f32 %v756, %v757
  %v759 = vrot.slane %v758, 1
  %v760 = vadd.f32 %v758, %v759
  %v761 = vrot.slane %v716, 4
  %v762 = vadd.f32 %v716, %v761
  %v763 = vrot.slane %v762, 2
  %v764 = vadd.f32 %v762, %v763
  %v765 = vrot.slane %v764, 1
  %v766 = vadd.f32 %v764, %v765
  %v767 = vrcp.pop 8.0
  %v768 = vmul.f32 %v724, %v767
  %v769 = vmul.f32 %v730, %v767
  %v770 = vmul.f32 %v736, %v767
  %v771 = vmul.f32 %v742, %v767
  %v772 = vmul.f32 %v748, %v767
  %v773 = vmul.f32 %v754, %v767
  %v774 = vmul.f32 %v760, %v767
  %v775 = vmul.f32 %v766, %v767
  %v776 = vpack.c.bf16 %v768, %v768
  %v777 = vpack.c.bf16 %v769, %v769
  %v778 = vpack.c.bf16 %v770, %v770
  %v779 = vpack.c.bf16 %v771, %v771
  %v780 = vpack.c.bf16 %v772, %v772
  %v781 = vpack.c.bf16 %v773, %v773
  %v782 = vpack.c.bf16 %v774, %v774
  %v783 = vpack.c.bf16 %v775, %v775
  %v784 = vld [vmem:[%s6] sm:$0xf]
  %v785 = vld [vmem:[%s6 + $0x4] sm:$0xf]
  %v786 = vld [vmem:[%s6 + $0x8] sm:$0xf]
  %v787 = vld [vmem:[%s6 + $0xc] sm:$0xf]
  %v788 = vld [vmem:[%s6 + $0x10] sm:$0xf]
  %v789 = vld [vmem:[%s6 + $0x14] sm:$0xf]
  %v790 = vld [vmem:[%s6 + $0x18] sm:$0xf]
  %v791 = vld [vmem:[%s6 + $0x1c] sm:$0xf]
  %v792 = vld [vmem:[%s6 + $0x20] sm:$0xf]
  %v793 = vld [vmem:[%s6 + $0x24] sm:$0xf]
  %v794 = vld [vmem:[%s6 + $0x28] sm:$0xf]
  %v795 = vld [vmem:[%s6 + $0x2c] sm:$0xf]
  %v796 = vld [vmem:[%s6 + $0x30] sm:$0xf]
  %v797 = vld [vmem:[%s6 + $0x34] sm:$0xf]
  %v798 = vld [vmem:[%s6 + $0x38] sm:$0xf]
  %v799 = vld [vmem:[%s6 + $0x3c] sm:$0xf]
  %v808 = vunpack.c.l.b16 %v776
  %v809 = vunpack.c.l.b16 %v777
  %v810 = vunpack.c.l.b16 %v778
  %v811 = vunpack.c.l.b16 %v779
  %v812 = vunpack.c.l.b16 %v780
  %v813 = vunpack.c.l.b16 %v781
  %v814 = vunpack.c.l.b16 %v782
  %v815 = vunpack.c.l.b16 %v783
  %v816 = vsel %vm454, %v809, %v808
  %v817 = vsel %vm456, %v810, %v816
  %v818 = vsel %vm458, %v811, %v817
  %v819 = vsel %vm460, %v812, %v818
  %v820 = vsel %vm462, %v813, %v819
  %v821 = vsel %vm464, %v814, %v820
  %v822 = vsel %vm466, %v815, %v821
  %v823 = vpack.c.b16 %v822, %v822
  %v841 = vunpack.c.l.b16 %v784
  %v842 = vunpack.c.l.b16 %v785
  %v843 = vunpack.c.l.b16 %v786
  %v844 = vunpack.c.l.b16 %v787
  %v845 = vunpack.c.l.b16 %v788
  %v846 = vunpack.c.l.b16 %v789
  %v847 = vunpack.c.l.b16 %v790
  %v848 = vunpack.c.l.b16 %v791
  %v849 = vunpack.c.l.b16 %v792
  %v850 = vunpack.c.l.b16 %v793
  %v851 = vunpack.c.l.b16 %v794
  %v852 = vunpack.c.l.b16 %v795
  %v853 = vunpack.c.l.b16 %v796
  %v854 = vunpack.c.l.b16 %v797
  %v855 = vunpack.c.l.b16 %v798
  %v856 = vunpack.c.l.b16 %v799
  %v857 = vpack.c.b16 %v842, %v841
  %v858 = vpack.c.b16 %v844, %v843
  %v859 = vpack.c.b16 %v846, %v845
  %v860 = vpack.c.b16 %v848, %v847
  %v861 = vpack.c.b16 %v850, %v849
  %v862 = vpack.c.b16 %v852, %v851
  %v863 = vpack.c.b16 %v854, %v853
  %v864 = vpack.c.b16 %v856, %v855
  %873 = vmatprep.subr.bf16.mxu0 0
  %874 = vmatpush1.bf16.msra.mxu0 %v857
  %875 = vmatprep.subr.bf16.mxu0 0
  %876 = vmatpush1.bf16.msra.mxu0 %v858
  %877 = vmatprep.subr.bf16.mxu0 0
  %878 = vmatpush1.bf16.msra.mxu0 %v859
  %879 = vmatprep.subr.bf16.mxu0 0
  %880 = vmatpush1.bf16.msra.mxu0 %v860
  %881 = vmatprep.subr.bf16.mxu0 0
  %882 = vmatpush1.bf16.msra.mxu0 %v861
  %883 = vmatprep.subr.bf16.mxu0 0
  %884 = vmatpush1.bf16.msra.mxu0 %v862
  %885 = vmatprep.subr.bf16.mxu0 0
  %886 = vmatpush1.bf16.msra.mxu0 %v863
  %887 = vmatprep.subr.bf16.mxu0 0
  %888 = vmatpush1.bf16.msra.mxu0 %v864
  %889 = vmatprep.subr.bf16.mxu0 0
  %890 = vmatpush1.bf16.msra.mxu0 0
  %891 = vmatprep.subr.bf16.mxu0 0
  %892 = vmatpush1.bf16.msra.mxu0 0
  %893 = vmatprep.subr.bf16.mxu0 0
  %894 = vmatpush1.bf16.msra.mxu0 0
  %895 = vmatprep.subr.bf16.mxu0 0
  %896 = vmatpush1.bf16.msra.mxu0 0
  %897 = vmatprep.subr.bf16.mxu0 0
  %898 = vmatpush1.bf16.msra.mxu0 0
  %899 = vmatprep.subr.bf16.mxu0 0
  %900 = vmatpush1.bf16.msra.mxu0 0
  %901 = vmatprep.subr.bf16.mxu0 0
  %902 = vmatpush1.bf16.msra.mxu0 0
  %903 = vmatprep.subr.bf16.mxu0 0
  %904 = vmatpush1.bf16.msra.mxu0 0
  %905 = vmatprep.mubr.bf16.mxu0 0
  %906 = vmatmul.mubr.bf16.gmra.mrb[0].mxu0 %v823
  %v907 = vpop.f32.mrb[0].mxu0
  %v908 = vadd.f32 0.0, %v907
  %v909 = vpop.f32.mrb[0].mxu0
  %v910 = vpop.f32.mrb[0].mxu0
  %v911 = vpop.f32.mrb[0].mxu0
  %912 = vdwg.mxu0
  %v913 = vmul.f32 %v553, %v553
  %914 = vadd.xlane.f32.xlu0 %v913
  %v915 = vpop.xlane.xlu0 %914
  %v916 = vrsqrt.pop %v915
  %v917 = vmul.f32 %v553, %v916
  %v918 = vmul.f32 %v908, %v908
  %919 = vadd.xlane.f32.xlu0 %v918
  %v920 = vpop.xlane.xlu0 %919
  %v921 = vrsqrt.pop %v920
  %v922 = vmul.f32 %v908, %v921
  %v923 = vpack.c.bf16 %v917, %v917
  %v924 = vpack.c.bf16 0.0, %v922
  %v925 = vpack.c.bf16 0.0, 0.0
  %926 = vmatprep.subr.bf16.mxu0 0
  %927 = vmatpush1.bf16.xpose.msra.mxu0 %v924
  %928 = vmatprep.subr.bf16.mxu0 0
  %929 = vmatpush1.bf16.xpose.msra.mxu0 %v925
  %930 = vmatprep.subr.bf16.mxu0 0
  %931 = vmatpush1.bf16.xpose.msra.mxu0 %v925
  %932 = vmatprep.subr.bf16.mxu0 0
  %933 = vmatpush1.bf16.xpose.msra.mxu0 %v925
  %934 = vmatprep.subr.bf16.mxu0 0
  %935 = vmatpush1.bf16.xpose.msra.mxu0 %v925
  %936 = vmatprep.subr.bf16.mxu0 0
  %937 = vmatpush1.bf16.xpose.msra.mxu0 %v925
  %938 = vmatprep.subr.bf16.mxu0 0
  %939 = vmatpush1.bf16.xpose.msra.mxu0 %v925
  %940 = vmatprep.subr.bf16.mxu0 0
  %941 = vmatpush1.bf16.xpose.msra.mxu0 %v925
  %942 = vmatprep.subr.bf16.mxu0 0
  %943 = vmatpush1.bf16.xpose.msra.mxu0 0
  %944 = vmatprep.subr.bf16.mxu0 0
  %945 = vmatpush1.bf16.xpose.msra.mxu0 0
  %946 = vmatprep.subr.bf16.mxu0 0
  %947 = vmatpush1.bf16.xpose.msra.mxu0 0
  %948 = vmatprep.subr.bf16.mxu0 0
  %949 = vmatpush1.bf16.xpose.msra.mxu0 0
  %950 = vmatprep.subr.bf16.mxu0 0
  %951 = vmatpush1.bf16.xpose.msra.mxu0 0
  %952 = vmatprep.subr.bf16.mxu0 0
  %953 = vmatpush1.bf16.xpose.msra.mxu0 0
  %954 = vmatprep.subr.bf16.mxu0 0
  %955 = vmatpush1.bf16.xpose.msra.mxu0 0
  %956 = vmatprep.subr.bf16.mxu0 0
  %957 = vmatpush1.bf16.xpose.msra.mxu0 0
  %958 = vmatprep.mubr.bf16.mxu0 0
  %959 = vmatmul.mubr.bf16.gmra.mrb[0].mxu0 %v923
  %v960 = vpop.f32.mrb[0].mxu0
  %v961 = vadd.f32 0.0, %v960
  %v962 = vpop.f32.mrb[0].mxu0
  %v963 = vpop.f32.mrb[0].mxu0
  %v964 = vpop.f32.mrb[0].mxu0
  %965 = vdwg.mxu0
  %s966 = sld [smem:[#allocation2]]
  %v967 = vstv %s966
  %v968 = vmul.f32 %v967, 1.442695
  %v969 = vpow.pop %v968
  %s970 = vtos %v969
  %v971 = vstv %s970
  %v972 = vmul.f32 %v971, %v961
  %973 = vst [vmem:[%s7] sm:$0xff] %v972
  // Predicated region
  $region30: #{ftclip_forward.1} parent=0 // pred_check
    _
  $region31: #{ftclip_forward.1} parent=0 // pred_check_branch
    %975 = sbr.rel (0) target = $region33
  $region32: #{ftclip_forward.1} parent=0 // pred_region
    _
  $region33: #{ftclip_forward.1} parent=0 // pred_fallthru
    _
  // Predicated region
  $region34: #{ftclip_forward.1} parent=0 // pred_check
    _
  $region35: #{ftclip_forward.1} parent=0 // pred_check_branch
    %977 = sbr.rel (0) target = $region37
  $region36: #{ftclip_forward.1} parent=0 // pred_region
    _
  $region37: #{ftclip_forward.1} parent=0 // pred_fallthru
    _

</llo_original>
